<compile_context>
chip_gen: v7x
topology: tpu7x:2x2x1
jax: 0.10.0
libtpu: 0.0.40
codegen_flags: <defaults>
</compile_context>

<pallas_src>
import functools

import jax
import jax.numpy as jnp
from jax import lax
from jax.experimental import pallas as pl
from jax.experimental.pallas import tpu as pltpu

_BIG = 1e30  # "infinite" bias used to zero padded rows/cols after the relu


def _contrastive_kernel(im_ref, s_ref, drow_ref, dcol_ref, *refs,
                        margin, max_violation, has_pad, tm, tn):
    i = pl.program_id(0)
    j = pl.program_id(1)

    if has_pad:
        mrow_ref, mcol_ref = refs[0], refs[1]
        out_refs = refs[2:]
    else:
        out_refs = refs

    # All-pairs scores for this (tm, tn) block; contract the lane (dim) axis of
    # both operands directly -> no transpose of s is materialized. Inputs may be
    # bf16; accumulation is f32 on the MXU.
    scores = lax.dot_general(
        im_ref[...], s_ref[...],
        dimension_numbers=(((1,), (1,)), ((), ())),
        preferred_element_type=jnp.float32)                  # (tm, tn) f32

    drow = drow_ref[...]                                     # (tm, 1)  diag / +BIG
    dcol = dcol_ref[...]                                     # (1, tn)  diag / +BIG

    cost_s = margin + scores - drow                          # hinge vs. image anchor
    cost_im = margin + scores - dcol                         # hinge vs. sentence anchor
    if has_pad:
        # -BIG on padded cols (cost_s) / padded rows (cost_im); relu kills them.
        cost_s = cost_s + mcol_ref[...]                      # (1, tn) broadcast
        cost_im = cost_im + mrow_ref[...]                    # (tm, 1) broadcast
    cost_s = jnp.maximum(cost_s, 0.0)
    cost_im = jnp.maximum(cost_im, 0.0)

    if not max_violation:
        # Lane-dense elementwise partial-sum accumulator, resident across j.
        # Diagonal terms are left in and corrected analytically in the wrapper.
        acc_ref, = out_refs
        total = cost_s + cost_im

        @pl.when(j == 0)
        def _():
            acc_ref[...] = total

        @pl.when(j > 0)
        def _():
            acc_ref[...] += total
    else:
        rowmax_ref, colmax_ref = out_refs

        # Costs are >= 0, so zero is a correct identity for the running max.
        @pl.when(j == 0)
        def _():
            rowmax_ref[...] = jnp.zeros_like(rowmax_ref)

        def _update(cs, ci):
            # Row max folded over j elementwise (pure VPU); final lane reduce in XLA.
            rowmax_ref[...] = jnp.maximum(rowmax_ref[...], cs)
            # Column max reduced to an 8-sublane partial with static tile-aligned
            # slices + elementwise max (pure VPU, no XLU); finished in XLA.
            part = ci[0:8, :]
            for r in range(1, tm // 8):
                part = jnp.maximum(part, ci[r * 8:(r + 1) * 8, :])
            colmax_ref[...] = part

        # Diagonal masking only touches blocks on the main diagonal (tm == tn).
        @pl.when(i == j)
        def _():
            rg = lax.broadcasted_iota(jnp.int32, (tm, tn), 0)
            cg = lax.broadcasted_iota(jnp.int32, (tm, tn), 1)
            on_diag = rg == cg
            _update(jnp.where(on_diag, 0.0, cost_s),
                    jnp.where(on_diag, 0.0, cost_im))

        @pl.when(i != j)
        def _():
            _update(cost_s, cost_im)


def _round_up(x, m):
    return (x + m - 1) // m * m


def contrastive_loss(im, s, margin=0.0, max_violation=False,
                     block=None, compute_dtype=jnp.bfloat16):
    """Pallas TPU implementation of ContrastiveLoss.forward (cosine measure)."""
    assert im.ndim == 2 and s.ndim == 2 and im.shape == s.shape
    B, D = im.shape

    try:
        dk = jax.devices()[0].device_kind.lower()
    except Exception:  # pragma: no cover
        dk = ""
    is_v5 = "v5" in dk
    cap = 256 if ("v6" in dk or "v7" in dk) else 128   # match MXU width

    if block is None:
        if B <= cap:
            B_pad = _round_up(B, 8)
            tile = B_pad
        else:
            tile = cap if B % cap == 0 else (128 if B % 128 == 0 else cap)
            B_pad = _round_up(B, tile)
    else:
        tile = int(block)
        B_pad = _round_up(B, tile)
        assert tile % 8 == 0
        assert tile == B_pad or tile % 128 == 0, (
            "block must equal the padded batch or be a multiple of 128")
    tm = tn = tile
    ni, nj = B_pad // tm, B_pad // tn
    pad = B_pad - B
    has_pad = pad > 0

    cd = jnp.dtype(compute_dtype)
    im_c = im.astype(cd)
    s_c = s.astype(cd)
    if pad:
        im_c = jnp.pad(im_c, ((0, pad), (0, 0)))
        s_c = jnp.pad(s_c, ((0, pad), (0, 0)))

    # Diagonal <im[k], s[k]> computed once, from the same (rounded) MXU feed.
    diag = jnp.sum(im_c.astype(jnp.float32) * s_c.astype(jnp.float32), axis=1)
    valid = jnp.arange(B_pad) < B
    dvec = jnp.where(valid, diag, _BIG).astype(jnp.float32)   # +BIG kills padded anchors
    drow = dvec.reshape(B_pad, 1)
    dcol = dvec.reshape(1, B_pad)

    inputs = [im_c, s_c, drow, dcol]

    s_spec_kwargs = {}
    if is_v5:
        # v5e: lowest HBM BW; deepen pipeline on the tile whose index changes every step.
        s_spec_kwargs["pipeline_mode"] = pl.Buffered(3)

    in_specs = [
        pl.BlockSpec((tm, D), lambda i, j: (i, 0)),                    # im rows (block-row i)
        pl.BlockSpec((tn, D), lambda i, j: (j, 0), **s_spec_kwargs),   # s rows (block-col j)
        pl.BlockSpec((tm, 1), lambda i, j: (i, 0)),                    # d1
        pl.BlockSpec((1, tn), lambda i, j: (0, j)),                    # d2 (lane-dense)
    ]
    if has_pad:
        mvec = jnp.where(valid, 0.0, -_BIG).astype(jnp.float32)
        inputs += [mvec.reshape(B_pad, 1), mvec.reshape(1, B_pad)]
        in_specs += [
            pl.BlockSpec((tm, 1), lambda i, j: (i, 0)),
            pl.BlockSpec((1, tn), lambda i, j: (0, j)),
        ]

    if max_violation:
        out_shape = (
            jax.ShapeDtypeStruct((B_pad, tn), jnp.float32),       # row-max folded over j
            jax.ShapeDtypeStruct((ni * 8, B_pad), jnp.float32),   # 8-sublane col-max partials
        )
        out_specs = [
            pl.BlockSpec((tm, tn), lambda i, j: (i, 0)),
            pl.BlockSpec((8, tn), lambda i, j: (i, j)),
        ]
    else:
        out_shape = jax.ShapeDtypeStruct((B_pad, tn), jnp.float32)
        out_specs = pl.BlockSpec((tm, tn), lambda i, j: (i, 0))

    kernel = functools.partial(
        _contrastive_kernel, margin=float(margin),
        max_violation=bool(max_violation), has_pad=has_pad, tm=tm, tn=tn)

    # Explicit VMEM budget: double-buffered streamed tiles + resident output block.
    in_bytes = (tm + tn) * D * cd.itemsize + (tm + tn) * 4 * (2 if has_pad else 1)
    out_bytes = tm * tn * 4 + (8 * tn * 4 if max_violation else 0)
    vmem_limit = int(min(max(4 * (in_bytes + out_bytes) + (8 << 20), 32 << 20),
                         56 << 20))

    grid_spec = pltpu.PrefetchScalarGridSpec(
        num_scalar_prefetch=0,
        grid=(ni, nj),
        in_specs=in_specs,
        out_specs=out_specs,
    )

    outs = pl.pallas_call(
        kernel,
        out_shape=out_shape,
        grid_spec=grid_spec,
        compiler_params=pltpu.CompilerParams(
            dimension_semantics=("parallel", "arbitrary"),   # i is megacore-shardable
            vmem_limit_bytes=vmem_limit),
    )(*inputs)

    if max_violation:
        rowmax_out, colmax_out = outs
        return (jnp.sum(jnp.max(rowmax_out, axis=1)) +
                jnp.sum(jnp.max(colmax_out, axis=0)))
    # The full sum includes the 2*B diagonal hinge terms (each == max(margin, 0));
    # padded rows/cols contribute exactly zero.
    return jnp.sum(outs) - 2.0 * B * max(float(margin), 0.0)


def _reference(im, s, margin=0.0, max_violation=False):
    scores = jnp.dot(im, s.T, precision=lax.Precision.HIGHEST)
    diag = jnp.diag(scores)
    cost_s = jnp.maximum(margin + scores - diag[:, None], 0.0)
    cost_im = jnp.maximum(margin + scores - diag[None, :], 0.0)
    off = 1.0 - jnp.eye(scores.shape[0], dtype=scores.dtype)
    cost_s = cost_s * off
    cost_im = cost_im * off
    if max_violation:
        return jnp.sum(jnp.max(cost_s, axis=1)) + jnp.sum(jnp.max(cost_im, axis=0))
    return jnp.sum(cost_s) + jnp.sum(cost_im)


if __name__ == "__main__":
    key = jax.random.PRNGKey(0)

    def make(k, b, d):
        # VSE embeddings are l2-normalized upstream; do the same here as glue.
        x = jax.random.normal(k, (b, d), dtype=jnp.float32)
        return x / jnp.linalg.norm(x, axis=1, keepdims=True)

    k1, k2, k3, k4, k5, k6 = jax.random.split(key, 6)

    # 1) Module defaults (margin=0, cosine, max_violation=False), single block, f32.
    im, s = make(k1, 8, 32), make(k2, 8, 32)
    out = jax.block_until_ready(
        contrastive_loss(im, s, 0.0, False, compute_dtype=jnp.float32))
    ref = _reference(im, s, 0.0, False)
    assert jnp.allclose(out, ref, rtol=5e-4, atol=5e-4), (out, ref)

    # 2) Batch not a multiple of 8 -> exercises padding/masking, both paths, f32.
    im, s = make(k3, 13, 32), make(k4, 13, 32)
    for mv in (False, True):
        out = jax.block_until_ready(
            contrastive_loss(im, s, 0.2, mv, compute_dtype=jnp.float32))
        ref = _reference(im, s, 0.2, mv)
        assert jnp.allclose(out, ref, rtol=5e-4, atol=5e-4), (mv, out, ref)

    # 3) Multi-block grid (2x2 tiles of 128), both paths, f32 (tight) and bf16 (loose).
    im, s = make(k5, 256, 64), make(k6, 256, 64)
    for mv in (False, True):
        out = jax.block_until_ready(
            contrastive_loss(im, s, 0.2, mv, block=128, compute_dtype=jnp.float32))
        ref = _reference(im, s, 0.2, mv)
        assert jnp.allclose(out, ref, rtol=5e-4, atol=1e-3), (mv, out, ref)

        out_bf = jax.block_until_ready(
            contrastive_loss(im, s, 0.2, mv, block=128, compute_dtype=jnp.bfloat16))
        im_r = im.astype(jnp.bfloat16).astype(jnp.float32)
        s_r = s.astype(jnp.bfloat16).astype(jnp.float32)
        ref_bf = _reference(im_r, s_r, 0.2, mv)
        assert jnp.allclose(out_bf, ref_bf, rtol=5e-3, atol=5e-2), (mv, out_bf, ref_bf)

    print("KERNEL_OK")
</pallas_src>

<mosaic_0001>
module attributes {stable_mosaic.version = 11 : i64} {
  func.func @_contrastive_kernel(%arg0: i32, %arg1: i32, %arg2: memref<8x32xf32, #tpu.memory_space<vmem>>, %arg3: memref<8x32xf32, #tpu.memory_space<vmem>>, %arg4: memref<8x1xf32, #tpu.memory_space<vmem>>, %arg5: memref<1x8xf32, #tpu.memory_space<vmem>>, %arg6: memref<8x8xf32, #tpu.memory_space<vmem>>) attributes {dimension_semantics = [#tpu.dimension_semantics<parallel>, #tpu.dimension_semantics<arbitrary>], iteration_bounds = array<i64: 1, 1>, scalar_prefetch = 0 : i64, scratch_operands = 0 : i64, tpu.core_type = #tpu.core_type<tc>, window_params = [{transform_indices = @transform_0, window_bounds = array<i64: 8, 32>}, {transform_indices = @transform_1, window_bounds = array<i64: 8, 32>}, {transform_indices = @transform_2, window_bounds = array<i64: 8, 1>}, {transform_indices = @transform_3, window_bounds = array<i64: 1, 8>}, {transform_indices = @transform_4, window_bounds = array<i64: 8, 8>}]} {
    %c0 = arith.constant 0 : index
    %c0_0 = arith.constant 0 : index
    %0 = vector.load %arg2[%c0, %c0_0] : memref<8x32xf32, #tpu.memory_space<vmem>>, vector<8x32xf32>
    %c0_1 = arith.constant 0 : index
    %c0_2 = arith.constant 0 : index
    %1 = vector.load %arg3[%c0_1, %c0_2] : memref<8x32xf32, #tpu.memory_space<vmem>>, vector<8x32xf32>
    %cst = arith.constant dense<0.000000e+00> : vector<8x8xf32>
    %2 = tpu.matmul %0, %1, %cst {dimension_numbers = #tpu.dot_dimension_numbers<[1], [1], [0], [0], [0, 0, 1, 0], [], []>} : vector<8x32xf32>, vector<8x32xf32>, vector<8x8xf32> -> vector<8x8xf32>
    %c0_3 = arith.constant 0 : index
    %c0_4 = arith.constant 0 : index
    %3 = vector.load %arg4[%c0_3, %c0_4] : memref<8x1xf32, #tpu.memory_space<vmem>>, vector<8x1xf32>
    %c0_5 = arith.constant 0 : index
    %c0_6 = arith.constant 0 : index
    %4 = vector.load %arg5[%c0_5, %c0_6] : memref<1x8xf32, #tpu.memory_space<vmem>>, vector<1x8xf32>
    %cst_7 = arith.constant 0.000000e+00 : f32
    %5 = vector.broadcast %cst_7 : f32 to vector<8x8xf32>
    %6 = arith.addf %5, %2 : vector<8x8xf32>
    %7 = vector.broadcast %3 : vector<8x1xf32> to vector<8x8xf32>
    %8 = arith.subf %6, %7 : vector<8x8xf32>
    %cst_8 = arith.constant 0.000000e+00 : f32
    %9 = vector.broadcast %cst_8 : f32 to vector<8x8xf32>
    %10 = arith.addf %9, %2 : vector<8x8xf32>
    %11 = vector.broadcast %4 : vector<1x8xf32> to vector<8x8xf32>
    %12 = arith.subf %10, %11 : vector<8x8xf32>
    %cst_9 = arith.constant 0.000000e+00 : f32
    %13 = vector.broadcast %cst_9 : f32 to vector<8x8xf32>
    %14 = arith.maximumf %8, %13 : vector<8x8xf32>
    %cst_10 = arith.constant 0.000000e+00 : f32
    %15 = vector.broadcast %cst_10 : f32 to vector<8x8xf32>
    %16 = arith.maximumf %12, %15 : vector<8x8xf32>
    %17 = arith.addf %14, %16 : vector<8x8xf32>
    %c0_i32 = arith.constant 0 : i32
    %18 = arith.cmpi eq, %arg1, %c0_i32 : i32
    %19 = arith.extui %18 : i1 to i32
    %c0_i32_11 = arith.constant 0 : i32
    %20 = arith.cmpi ne, %19, %c0_i32_11 : i32
    scf.if %20 {
      %c0_14 = arith.constant 0 : index
      %c0_15 = arith.constant 0 : index
      %24 = vector.load %arg6[%c0_14, %c0_15] : memref<8x8xf32, #tpu.memory_space<vmem>>, vector<8x8xf32>
      tpu.vector_store %arg6[%c0_14, %c0_15], %17 {strides = array<i32>} : memref<8x8xf32, #tpu.memory_space<vmem>>, vector<8x8xf32>,
    } else {
    }
    %c0_i32_12 = arith.constant 0 : i32
    %21 = arith.cmpi sgt, %arg1, %c0_i32_12 : i32
    %22 = arith.extui %21 : i1 to i32
    %c0_i32_13 = arith.constant 0 : i32
    %23 = arith.cmpi ne, %22, %c0_i32_13 : i32
    scf.if %23 {
      %c0_14 = arith.constant 0 : index
      %c0_15 = arith.constant 0 : index
      %24 = vector.load %arg6[%c0_14, %c0_15] : memref<8x8xf32, #tpu.memory_space<vmem>>, vector<8x8xf32>
      %25 = arith.addf %24, %17 : vector<8x8xf32>
      %c0_16 = arith.constant 0 : index
      %c0_17 = arith.constant 0 : index
      %26 = vector.load %arg6[%c0_16, %c0_17] : memref<8x8xf32, #tpu.memory_space<vmem>>, vector<8x8xf32>
      tpu.vector_store %arg6[%c0_16, %c0_17], %25 {strides = array<i32>} : memref<8x8xf32, #tpu.memory_space<vmem>>, vector<8x8xf32>,
    } else {
    }
    return
  }
  func.func @transform_0(%arg0: i32, %arg1: i32) -> (i32, i32) {
    %c0_i32 = arith.constant 0 : i32
    %c0_i32_0 = arith.constant 0 : i32
    return %arg0, %c0_i32 : i32, i32
  }
  func.func @transform_1(%arg0: i32, %arg1: i32) -> (i32, i32) {
    %c0_i32 = arith.constant 0 : i32
    %c0_i32_0 = arith.constant 0 : i32
    return %arg1, %c0_i32 : i32, i32
  }
  func.func @transform_2(%arg0: i32, %arg1: i32) -> (i32, i32) {
    %c0_i32 = arith.constant 0 : i32
    %c0_i32_0 = arith.constant 0 : i32
    return %arg0, %c0_i32 : i32, i32
  }
  func.func @transform_3(%arg0: i32, %arg1: i32) -> (i32, i32) {
    %c0_i32 = arith.constant 0 : i32
    %c0_i32_0 = arith.constant 0 : i32
    return %c0_i32, %arg1 : i32, i32
  }
  func.func @transform_4(%arg0: i32, %arg1: i32) -> (i32, i32) {
    %c0_i32 = arith.constant 0 : i32
    %c0_i32_0 = arith.constant 0 : i32
    return %arg0, %c0_i32 : i32, i32
  }
}

</mosaic_0001>

<llo_original>
// kernel: tpu_custom_call.1
$region0: #{tpu_custom_call.1}
  #allocation0 [shape = 'u32[]', space=smem, size = 0x4, offset = 0x4, fixed_abs, tag = 'smem constant byte address 0x4 - core index']
  #allocation1 [shape = 'u32[144,128]{1,0:T(1,128)}', space=vmem, size = 0x12000, scoped, tag = 'internal scratch']
  %s0 = inlined_call_operand.vmem [shape: f32[8,32], index: 0, kind: input, shape index: {}]
  %s1 = inlined_call_operand.hbm [shape: f32[8,32], index: 1, kind: input, shape index: {}]
  %s2 = inlined_call_operand.vmem [shape: f32[8,1], index: 2, kind: input, shape index: {}]
  %s3 = inlined_call_operand.vmem [shape: f32[1,8], index: 3, kind: input, shape index: {}]
  %s4 = inlined_call_operand.hbm [shape: f32[8,8], index: 4, kind: output, shape index: {}]
  %s5 = sld [smem:[#allocation0]]
  $region38: #{tpu_custom_call.1} parent=0
    _
  %s7 = ssub.s32 1, %s5
  %s8 = scalar_select 0, %s7, %s5
  $region1: #{tpu_custom_call.1} parent=0
    #allocation2 [shape = 'u8[4096]{0}', space=vmem, size = 0x1000, scoped, tag = 'input window, operand 1, single buffered']
    #allocation3 [shape = 's32[1]{0}', space=sflag, size = 0x4, scoped, tag = 'scoped memory for tpu_custom_call.1']
    #allocation4 [shape = 's32[1]{0}', space=sflag, size = 0x4, scoped, tag = 'scoped memory for tpu_custom_call.1']
    #allocation5 [shape = 'u8[4096]{0}', space=vmem, size = 0x1000, scoped, tag = 'output window, operand 0, single buffered']
    %9 = vsyncpa [#allocation3], 0
    %10 = vsyncpa [#allocation4], 0
    // Predicated region
    $region2: #{tpu_custom_call.1} parent=1 // pred_check
      _
    $region3: #{tpu_custom_call.1} parent=1 // pred_check_branch
      %12 = sbr.rel (0) target = $region5
    $region4: #{tpu_custom_call.1} parent=1 // pred_region
      _
    $region5: #{tpu_custom_call.1} parent=1 // pred_fallthru
      _
    // Predicated region
    $region6: #{tpu_custom_call.1} parent=1 // pred_check
      _
    $region7: #{tpu_custom_call.1} parent=1 // pred_check_branch
      %14 = sbr.rel (0) target = $region9
    $region8: #{tpu_custom_call.1} parent=1 // pred_region
      %s16 = ssub.s32 128, 128
      %17 = vsyncadd [#allocation3], %s16
      %s19 = sshll.u32 [#allocation2], 4
      %s20 = int_to_ptr.vmem [resolvable:$true] %s19
      %22 = dma.hbm_to_vmem [thread:$0]  %s1, 128, %s20, [#allocation3]
    $region9: #{tpu_custom_call.1} parent=1 // pred_fallthru
      _
    // Predicated region
    $region10: #{tpu_custom_call.1} parent=1 // pred_check
      _
    $region11: #{tpu_custom_call.1} parent=1 // pred_check_branch
      %24 = sbr.rel (0) target = $region13
    $region12: #{tpu_custom_call.1} parent=1 // pred_region
      _
    $region13: #{tpu_custom_call.1} parent=1 // pred_fallthru
      _
    // Predicated region
    $region14: #{tpu_custom_call.1} parent=1 // pred_check
      _
    $region15: #{tpu_custom_call.1} parent=1 // pred_check_branch
      %26 = sbr.rel (0) target = $region17
    $region16: #{tpu_custom_call.1} parent=1 // pred_region
      _
    $region17: #{tpu_custom_call.1} parent=1 // pred_fallthru
      _
    // Predicated region
    $region18: #{tpu_custom_call.1} parent=1 // pred_check
      _
    $region19: #{tpu_custom_call.1} parent=1 // pred_check_branch
      %28 = sbr.rel (0) target = $region21
    $region20: #{tpu_custom_call.1} parent=1 // pred_region
      %29 = dma.done [#allocation3], 128
    $region21: #{tpu_custom_call.1} parent=1 // pred_fallthru
      _
    %v30 = vld [vmem:[%s0] sm:$0xff]
    %v31 = vld [vmem:[#allocation2] sm:$0xff]
    %v32 = vld [vmem:[%s2] sm:$0xff]
    %v33 = vld [vmem:[%s3] sm:$0x1]
    %vm34 = vcmask 261120
    %v36 = vsel %vm34, %v30, 0
    %v39 = vsel %vm34, %v31, 0
    %41 = vmatprep.subr.mxu0 0.0
    %42 = vmatpush1.xpose.msra.mxu0 %v39
    %43 = vmatprep.subr.mxu0 0.0
    %44 = vmatpush1.xpose.msra.mxu0 0.0
    %45 = vmatprep.subr.mxu0 0.0
    %46 = vmatpush1.xpose.msra.mxu0 0.0
    %47 = vmatprep.subr.mxu0 0.0
    %48 = vmatpush1.xpose.msra.mxu0 0.0
    %49 = vmatprep.subr.mxu0 0.0
    %50 = vmatpush1.xpose.msra.mxu0 0.0
    %51 = vmatprep.subr.mxu0 0.0
    %52 = vmatpush1.xpose.msra.mxu0 0.0
    %53 = vmatprep.subr.mxu0 0.0
    %54 = vmatpush1.xpose.msra.mxu0 0.0
    %55 = vmatprep.subr.mxu0 0.0
    %56 = vmatpush1.xpose.msra.mxu0 0.0
    %57 = vmatprep.subr.mxu0 0.0
    %58 = vmatpush1.xpose.msra.mxu0 0.0
    %59 = vmatprep.subr.mxu0 0.0
    %60 = vmatpush1.xpose.msra.mxu0 0.0
    %61 = vmatprep.subr.mxu0 0.0
    %62 = vmatpush1.xpose.msra.mxu0 0.0
    %63 = vmatprep.subr.mxu0 0.0
    %64 = vmatpush1.xpose.msra.mxu0 0.0
    %65 = vmatprep.subr.mxu0 0.0
    %66 = vmatpush1.xpose.msra.mxu0 0.0
    %67 = vmatprep.subr.mxu0 0.0
    %68 = vmatpush1.xpose.msra.mxu0 0.0
    %69 = vmatprep.subr.mxu0 0.0
    %70 = vmatpush1.xpose.msra.mxu0 0.0
    %71 = vmatprep.subr.mxu0 0.0
    %72 = vmatpush1.xpose.msra.mxu0 0.0
    %73 = vmatprep.subr.mxu0 0.0
    %74 = vmatpush1.xpose.msra.mxu0 0.0
    %75 = vmatprep.subr.mxu0 0.0
    %76 = vmatpush1.xpose.msra.mxu0 0.0
    %77 = vmatprep.subr.mxu0 0.0
    %78 = vmatpush1.xpose.msra.mxu0 0.0
    %79 = vmatprep.subr.mxu0 0.0
    %80 = vmatpush1.xpose.msra.mxu0 0.0
    %81 = vmatprep.subr.mxu0 0.0
    %82 = vmatpush1.xpose.msra.mxu0 0.0
    %83 = vmatprep.subr.mxu0 0.0
    %84 = vmatpush1.xpose.msra.mxu0 0.0
    %85 = vmatprep.subr.mxu0 0.0
    %86 = vmatpush1.xpose.msra.mxu0 0.0
    %87 = vmatprep.subr.mxu0 0.0
    %88 = vmatpush1.xpose.msra.mxu0 0.0
    %89 = vmatprep.subr.mxu0 0.0
    %90 = vmatpush1.xpose.msra.mxu0 0.0
    %91 = vmatprep.subr.mxu0 0.0
    %92 = vmatpush1.xpose.msra.mxu0 0.0
    %93 = vmatprep.subr.mxu0 0.0
    %94 = vmatpush1.xpose.msra.mxu0 0.0
    %95 = vmatprep.subr.mxu0 0.0
    %96 = vmatpush1.xpose.msra.mxu0 0.0
    %97 = vmatprep.subr.mxu0 0.0
    %98 = vmatpush1.xpose.msra.mxu0 0.0
    %99 = vmatprep.subr.mxu0 0.0
    %100 = vmatpush1.xpose.msra.mxu0 0.0
    %101 = vmatprep.subr.mxu0 0.0
    %102 = vmatpush1.xpose.msra.mxu0 0.0
    %103 = vmatprep.subr.mxu0 0.0
    %104 = vmatpush1.xpose.msra.mxu0 0.0
    %105 = vmatprep.mubr.f32.mxu0 0.0
    %106 = vmatmul.mubr.f32.gmra.mrb[0].mxu0 %v36
    %v107 = vpop.f32.mrb[0].mxu0
    %v108 = vadd.f32 0.0, %v107
    %v109 = vpop.f32.mrb[0].mxu0
    %110 = vdwg.mxu0
    %112 = vset.pattern.permute.xlu0 0
    %113 = vperm.xlu0 %112, %v32
    %v114 = vpop.permute.xlu0 %113
    %v116 = vsub.f32 %v108, %v114
    %v118 = vlaneseq
    %v119 = vshrl.u32 %v118, 7
    %v120 = vsub.s32 0, %v119
    %v121 = vrot.slane %v33, %v120
    %v123 = vsub.f32 %v108, %v121
    %v124 = vmax.f32 %v116, 0.0
    %v125 = vmax.f32 %v123, 0.0
    %v126 = vadd.f32 %v124, %v125
    %p127 = scmp.eq.s32.totalorder 0, 0
    // Predicated region
    $region22: #{tpu_custom_call.1} parent=1 // pred_check
      %p128 = pneg %p127
    $region23: #{tpu_custom_call.1} parent=1 // pred_check_branch
      %130 = sbr.rel (%p128) target = $region25
    $region24: #{tpu_custom_call.1} parent=1 // pred_region
      %vm131 = vcmask 64512
      %132 = vst.msk [vmem:[#allocation5] sm:$0xff] %vm131, %v126
    $region25: #{tpu_custom_call.1} parent=1 // pred_fallthru
      _
    %p133 = scmp.gt.s32.totalorder 0, 0
    // Predicated region
    $region26: #{tpu_custom_call.1} parent=1 // pred_check
      %p134 = pneg %p133
    $region27: #{tpu_custom_call.1} parent=1 // pred_check_branch
      %136 = sbr.rel (%p134) target = $region29
    $region28: #{tpu_custom_call.1} parent=1 // pred_region
      %v137 = vld [vmem:[#allocation5] sm:$0xff]
      %v138 = vadd.f32 %v137, %v126
      %vm139 = vcmask 64512
      %140 = vst.msk [vmem:[#allocation5] sm:$0xff] %vm139, %v138
    $region29: #{tpu_custom_call.1} parent=1 // pred_fallthru
      _
    // Predicated region
    $region30: #{tpu_custom_call.1} parent=1 // pred_check
      _
    $region31: #{tpu_custom_call.1} parent=1 // pred_check_branch
      %142 = sbr.rel (0) target = $region33
    $region32: #{tpu_custom_call.1} parent=1 // pred_region
      %s144 = ssub.s32 128, 128
      %145 = vsyncadd [#allocation4], %s144
      %s147 = sshll.u32 [#allocation5], 4
      %s148 = int_to_ptr.vmem [resolvable:$true] %s147
      %150 = dma.vmem_to_hbm [thread:$0]  %s148, 128, %s4, [#allocation4]
    $region33: #{tpu_custom_call.1} parent=1 // pred_fallthru
      _
    // Predicated region
    $region34: #{tpu_custom_call.1} parent=1 // pred_check
      _
    $region35: #{tpu_custom_call.1} parent=1 // pred_check_branch
      %152 = sbr.rel (0) target = $region37
    $region36: #{tpu_custom_call.1} parent=1 // pred_region
      %153 = dma.done [#allocation4], 128
    $region37: #{tpu_custom_call.1} parent=1 // pred_fallthru
      _
    %154 = vsyncpa [#allocation3], 1
    %155 = vsyncpa [#allocation4], 1

</llo_original>
